<compile_context>
chip_gen: v5e
topology: v5e:2x2
jax: 0.10.0
libtpu: 0.0.40
codegen_flags: <defaults>
</compile_context>

<pallas_src>
import functools

import jax
import jax.numpy as jnp
from jax.experimental import pallas as pl
from jax.experimental.pallas import tpu as pltpu


def _round_up(n: int, m: int) -> int:
    return ((n + m - 1) // m) * m


def _encoder_kernel(*refs, depth: int):
    """Fused encoder forward for one batch tile.

    refs (depth > 1):
        x_ref                 (tm, in_pad)                 bf16
        w0_ref, b0_ref        (in_pad, W), (1, W)          bf16 / f32
        wh_ref, bh_ref        (depth-1, W, W), (depth-1, 1, W)   bf16 / f32
        wo_ref, bo_ref        (W, lat_pad), (1, lat_pad)   bf16 / f32
        a_ref                 (depth, tm, W)               bf16 (out)
        z_ref                 (tm, lat_pad)                f32  (out)
    (depth == 1 drops wh_ref / bh_ref)
    """
    if depth > 1:
        (x_ref, w0_ref, b0_ref, wh_ref, bh_ref, wo_ref, bo_ref,
         a_ref, z_ref) = refs
    else:
        (x_ref, w0_ref, b0_ref, wo_ref, bo_ref, a_ref, z_ref) = refs
        wh_ref = bh_ref = None

    # Layer 0: (tm, in_pad) @ (in_pad, W) -> f32 acc, ReLU, round to bf16.
    y = jnp.dot(x_ref[...], w0_ref[...],
                preferred_element_type=jnp.float32) + b0_ref[...]
    h = jnp.maximum(y, 0.0).astype(jnp.bfloat16)
    a_ref[0, :, :] = h                       # bf16 activation writeback

    # Hidden layers: static unroll over the stacked (depth-1, W, W) operand.
    for l in range(1, depth):
        y = jnp.dot(h, wh_ref[l - 1],
                    preferred_element_type=jnp.float32) + bh_ref[l - 1]
        h = jnp.maximum(y, 0.0).astype(jnp.bfloat16)
        a_ref[l, :, :] = h

    # Output layer: lane-dense (128-wide padded) f32 store.
    z_ref[...] = jnp.dot(h, wo_ref[...],
                         preferred_element_type=jnp.float32) + bo_ref[...]


def _pick_batch_tile(b16: int) -> int:
    """Per-chip batch-tile selection (b16 is the 16-rounded batch)."""
    try:
        kind = jax.devices()[0].device_kind.lower()
    except Exception:  # pragma: no cover - defensive
        kind = ""
    cap = 128 if "v5" in kind else 256        # v5e MXU M=128; v6e/v7x M=256
    tm = min(b16, cap)
    # v7x has 2 TensorCores: make sure the "parallel" batch grid has >= 2 steps.
    if (("v7" in kind) or ("7x" in kind)) and b16 >= 32:
        tm = min(tm, max(16, _round_up(b16 // 2, 16)))
    return tm


def encoder_forward(params, x):
    """x: (B, C, H, W) NCHW, like the PyTorch module. Returns (z, [a...]).

    Precision: bf16 MXU inputs, f32 accumulation.  Returned activations are
    bf16 (exactly the values fed to the next layer); z is f32.
    """
    B = x.shape[0]
    h0 = x.reshape(B, -1)                     # nn.Flatten(start_dim=1)
    in_dim = h0.shape[1]

    depth = len(params["fcs"])
    width = params["fcs"][0][0].shape[1]
    w_out, b_out = params["fc_out"]
    latent = w_out.shape[1]

    # ---- TPU-friendly padding -------------------------------------------
    in_pad = _round_up(in_dim, 128)           # 784 -> 896 : full-width K tiles
    lat_pad = _round_up(latent, 128)          # 10  -> 128 : lane-dense vst
    b16 = _round_up(B, 16)                    # bf16 sublane packing (16 rows)
    tm = _pick_batch_tile(b16)
    b_pad = _round_up(b16, tm)

    # Padded input built directly in bf16 (single wrapper-side HBM pass).
    x_p = (jnp.zeros((b_pad, in_pad), jnp.bfloat16)
           .at[:B, :in_dim].set(h0.astype(jnp.bfloat16)))

    # ---- operands & specs (weights stay VMEM-resident: index_map -> 0) ----
    w0, b0 = params["fcs"][0]
    w0_p = (jnp.zeros((in_pad, width), jnp.bfloat16)
            .at[:in_dim, :].set(w0.astype(jnp.bfloat16)))
    b0_p = b0.reshape(1, width).astype(jnp.float32)

    w_out_p = (jnp.zeros((width, lat_pad), jnp.bfloat16)
               .at[:, :latent].set(w_out.astype(jnp.bfloat16)))
    b_out_p = (jnp.zeros((1, lat_pad), jnp.float32)
               .at[0, :latent].set(b_out.astype(jnp.float32)))

    ops = [x_p, w0_p, b0_p]
    in_specs = [
        pl.BlockSpec((tm, in_pad), lambda i: (i, 0)),
        pl.BlockSpec((in_pad, width), lambda i: (0, 0)),
        pl.BlockSpec((1, width), lambda i: (0, 0)),
    ]

    if depth > 1:
        # Stack identical (width, width) hidden layers into one 3-D operand.
        wh = jnp.stack([w.astype(jnp.bfloat16) for (w, _) in params["fcs"][1:]])
        bh = jnp.stack([b.reshape(1, width).astype(jnp.float32)
                        for (_, b) in params["fcs"][1:]])
        ops += [wh, bh]
        in_specs += [
            pl.BlockSpec((depth - 1, width, width), lambda i: (0, 0, 0)),
            pl.BlockSpec((depth - 1, 1, width), lambda i: (0, 0, 0)),
        ]

    ops += [w_out_p, b_out_p]
    in_specs += [
        pl.BlockSpec((width, lat_pad), lambda i: (0, 0)),
        pl.BlockSpec((1, lat_pad), lambda i: (0, 0)),
    ]

    out_shape = (
        jax.ShapeDtypeStruct((depth, b_pad, width), jnp.bfloat16),  # activations
        jax.ShapeDtypeStruct((b_pad, lat_pad), jnp.float32),        # z (padded)
    )
    out_specs = (
        pl.BlockSpec((depth, tm, width), lambda i: (0, i, 0)),
        pl.BlockSpec((tm, lat_pad), lambda i: (i, 0)),
    )

    # ---- explicit VMEM budget (portable to v7x's 64 MiB VMEM) -------------
    wb_bytes = 2 * (in_pad * width + max(depth - 1, 0) * width * width
                    + width * lat_pad)                  # bf16 weights
    wb_bytes += 4 * (depth * width + lat_pad)           # f32 biases
    tile_bytes = (tm * in_pad * 2                       # x tile (bf16)
                  + depth * tm * width * 2              # a tile (bf16)
                  + tm * lat_pad * 4)                   # z tile (f32)
    vmem_bytes = 2 * wb_bytes + 2 * tile_bytes + (8 << 20)  # dbl-buffer + slack
    vmem_bytes = int(max(16 << 20, min(vmem_bytes, 60 << 20)))

    a_stack, z_pad = pl.pallas_call(
        functools.partial(_encoder_kernel, depth=depth),
        out_shape=out_shape,
        grid=(b_pad // tm,),
        in_specs=in_specs,
        out_specs=out_specs,
        compiler_params=pltpu.CompilerParams(
            dimension_semantics=("parallel",),
            vmem_limit_bytes=vmem_bytes,
        ),
    )(*ops)

    z = z_pad[:B, :latent]
    activations = [a_stack[l, :B, :] for l in range(depth)]   # bf16
    return z, activations


def init_encoder_params(key, *, width=256, depth=1, latent_size=10,
                        img_size=(1, 28, 28)):
    """Same shapes as the PyTorch module, but weights stored pre-transposed as
    (in, out): fcs[0]: (prod(img_size), width); fcs[1:]: (width, width);
    fc_out: (width, latent_size)."""
    in_dim = int(img_size[0] * img_size[1] * img_size[2])
    dims = [in_dim] + [width] * depth
    params = {"fcs": [], "fc_out": None}
    for i in range(depth):
        key, kw, kb = jax.random.split(key, 3)
        scale = 1.0 / jnp.sqrt(jnp.float32(dims[i]))
        w = jax.random.uniform(kw, (dims[i], dims[i + 1]), jnp.float32,
                               minval=-scale, maxval=scale)
        b = jax.random.uniform(kb, (dims[i + 1],), jnp.float32,
                               minval=-scale, maxval=scale)
        params["fcs"].append((w, b))
    key, kw, kb = jax.random.split(key, 3)
    scale = 1.0 / jnp.sqrt(jnp.float32(width))
    w_out = jax.random.uniform(kw, (width, latent_size), jnp.float32,
                               minval=-scale, maxval=scale)
    b_out = jax.random.uniform(kb, (latent_size,), jnp.float32,
                               minval=-scale, maxval=scale)
    params["fc_out"] = (w_out, b_out)
    return params


if __name__ == "__main__":
    key = jax.random.PRNGKey(0)
    key, kx, kp = jax.random.split(key, 3)

    # Small, module-consistent shapes (depth=2 exercises the stacked-layer path).
    batch = 8
    img_size = (1, 28, 28)
    width = 256
    depth = 2
    latent_size = 10

    x = jax.random.normal(kx, (batch,) + img_size, dtype=jnp.float32)
    params = init_encoder_params(kp, width=width, depth=depth,
                                 latent_size=latent_size, img_size=img_size)

    z, acts = encoder_forward(params, x)
    z = jax.block_until_ready(z)
    acts = [jax.block_until_ready(a) for a in acts]

    assert z.shape == (batch, latent_size)
    assert len(acts) == depth and all(a.shape == (batch, width) for a in acts)

    # Reference 1: same bf16-input / f32-accumulate / bf16-activation chain in
    # plain JAX (the precision regime the kernel implements).
    hb = x.reshape(batch, -1).astype(jnp.bfloat16)
    ref_acts = []
    for (w, b) in params["fcs"]:
        y = jnp.dot(hb, w.astype(jnp.bfloat16),
                    preferred_element_type=jnp.float32) + b
        hb = jnp.maximum(y, 0.0).astype(jnp.bfloat16)
        ref_acts.append(hb)
    z_ref = jnp.dot(hb, params["fc_out"][0].astype(jnp.bfloat16),
                    preferred_element_type=jnp.float32) + params["fc_out"][1]

    assert jnp.allclose(z, z_ref, atol=2e-2, rtol=2e-2)
    for a, ar in zip(acts, ref_acts):
        assert jnp.allclose(a.astype(jnp.float32), ar.astype(jnp.float32),
                            atol=2e-2, rtol=2e-2)

    # Reference 2: full-f32 math (loose tolerance; checks overall semantics).
    hf = x.reshape(batch, -1)
    for (w, b) in params["fcs"]:
        hf = jnp.maximum(hf @ w + b, 0.0)
    z_f32 = hf @ params["fc_out"][0] + params["fc_out"][1]
    assert jnp.allclose(z, z_f32, atol=5e-2, rtol=5e-2)

    print("KERNEL_OK")
</pallas_src>

<mosaic_0001>
module attributes {stable_mosaic.version = 11 : i64} {
  func.func @_encoder_kernel(%arg0: i32, %arg1: memref<16x896xbf16, #tpu.memory_space<vmem>>, %arg2: memref<896x256xbf16, #tpu.memory_space<vmem>>, %arg3: memref<1x256xf32, #tpu.memory_space<vmem>>, %arg4: memref<1x256x256xbf16, #tpu.memory_space<vmem>>, %arg5: memref<1x1x256xf32, #tpu.memory_space<vmem>>, %arg6: memref<256x128xbf16, #tpu.memory_space<vmem>>, %arg7: memref<1x128xf32, #tpu.memory_space<vmem>>, %arg8: memref<2x16x256xbf16, #tpu.memory_space<vmem>>, %arg9: memref<16x128xf32, #tpu.memory_space<vmem>>) attributes {dimension_semantics = [#tpu.dimension_semantics<parallel>], iteration_bounds = array<i64: 1>, scalar_prefetch = 0 : i64, scratch_operands = 0 : i64, tpu.core_type = #tpu.core_type<tc>, window_params = [{transform_indices = @transform_0, window_bounds = array<i64: 16, 896>}, {pipeline_mode = #tpu.pipeline_mode<synchronous>, transform_indices = @transform_1, window_bounds = array<i64: 896, 256>}, {pipeline_mode = #tpu.pipeline_mode<synchronous>, transform_indices = @transform_2, window_bounds = array<i64: 1, 256>}, {pipeline_mode = #tpu.pipeline_mode<synchronous>, transform_indices = @transform_3, window_bounds = array<i64: 1, 256, 256>}, {pipeline_mode = #tpu.pipeline_mode<synchronous>, transform_indices = @transform_4, window_bounds = array<i64: 1, 1, 256>}, {pipeline_mode = #tpu.pipeline_mode<synchronous>, transform_indices = @transform_5, window_bounds = array<i64: 256, 128>}, {pipeline_mode = #tpu.pipeline_mode<synchronous>, transform_indices = @transform_6, window_bounds = array<i64: 1, 128>}, {transform_indices = @transform_7, window_bounds = array<i64: 2, 16, 256>}, {transform_indices = @transform_8, window_bounds = array<i64: 16, 128>}]} {
    %c0 = arith.constant 0 : index
    %c0_0 = arith.constant 0 : index
    %0 = vector.load %arg1[%c0, %c0_0] : memref<16x896xbf16, #tpu.memory_space<vmem>>, vector<16x896xbf16>
    %c0_1 = arith.constant 0 : index
    %c0_2 = arith.constant 0 : index
    %1 = vector.load %arg2[%c0_1, %c0_2] : memref<896x256xbf16, #tpu.memory_space<vmem>>, vector<896x256xbf16>
    %cst = arith.constant dense<0.000000e+00> : vector<16x256xf32>
    %2 = tpu.matmul %0, %1, %cst {dimension_numbers = #tpu.dot_dimension_numbers<[1], [0], [0], [1], [0, 0, 1, 1], [], []>} : vector<16x896xbf16>, vector<896x256xbf16>, vector<16x256xf32> -> vector<16x256xf32>
    %c0_3 = arith.constant 0 : index
    %c0_4 = arith.constant 0 : index
    %3 = vector.load %arg3[%c0_3, %c0_4] : memref<1x256xf32, #tpu.memory_space<vmem>>, vector<1x256xf32>
    %4 = vector.broadcast %3 : vector<1x256xf32> to vector<16x256xf32>
    %5 = arith.addf %2, %4 : vector<16x256xf32>
    %cst_5 = arith.constant 0.000000e+00 : f32
    %6 = vector.broadcast %cst_5 : f32 to vector<16x256xf32>
    %7 = arith.maximumf %5, %6 : vector<16x256xf32>
    %8 = arith.truncf %7 : vector<16x256xf32> to vector<16x256xbf16>
    %c0_6 = arith.constant 0 : index
    %c0_7 = arith.constant 0 : index
    %c0_8 = arith.constant 0 : index
    %9 = vector.load %arg8[%c0_6, %c0_7, %c0_8] : memref<2x16x256xbf16, #tpu.memory_space<vmem>>, vector<1x16x256xbf16>
    %10 = vector.shape_cast %9 : vector<1x16x256xbf16> to vector<16x256xbf16>
    %11 = vector.shape_cast %8 : vector<16x256xbf16> to vector<1x16x256xbf16>
    tpu.vector_store %arg8[%c0_6, %c0_7, %c0_8], %11 {strides = array<i32>} : memref<2x16x256xbf16, #tpu.memory_space<vmem>>, vector<1x16x256xbf16>,
    %c0_9 = arith.constant 0 : index
    %c0_10 = arith.constant 0 : index
    %c0_11 = arith.constant 0 : index
    %12 = vector.load %arg4[%c0_9, %c0_10, %c0_11] : memref<1x256x256xbf16, #tpu.memory_space<vmem>>, vector<1x256x256xbf16>
    %13 = vector.shape_cast %12 : vector<1x256x256xbf16> to vector<256x256xbf16>
    %cst_12 = arith.constant dense<0.000000e+00> : vector<16x256xf32>
    %14 = tpu.matmul %8, %13, %cst_12 {dimension_numbers = #tpu.dot_dimension_numbers<[1], [0], [0], [1], [0, 0, 1, 1], [], []>} : vector<16x256xbf16>, vector<256x256xbf16>, vector<16x256xf32> -> vector<16x256xf32>
    %c0_13 = arith.constant 0 : index
    %c0_14 = arith.constant 0 : index
    %c0_15 = arith.constant 0 : index
    %15 = vector.load %arg5[%c0_13, %c0_14, %c0_15] : memref<1x1x256xf32, #tpu.memory_space<vmem>>, vector<1x1x256xf32>
    %16 = vector.shape_cast %15 : vector<1x1x256xf32> to vector<1x256xf32>
    %17 = vector.broadcast %16 : vector<1x256xf32> to vector<16x256xf32>
    %18 = arith.addf %14, %17 : vector<16x256xf32>
    %cst_16 = arith.constant 0.000000e+00 : f32
    %19 = vector.broadcast %cst_16 : f32 to vector<16x256xf32>
    %20 = arith.maximumf %18, %19 : vector<16x256xf32>
    %21 = arith.truncf %20 : vector<16x256xf32> to vector<16x256xbf16>
    %c1 = arith.constant 1 : index
    %c0_17 = arith.constant 0 : index
    %c0_18 = arith.constant 0 : index
    %22 = vector.load %arg8[%c1, %c0_17, %c0_18] : memref<2x16x256xbf16, #tpu.memory_space<vmem>>, vector<1x16x256xbf16>
    %23 = vector.shape_cast %22 : vector<1x16x256xbf16> to vector<16x256xbf16>
    %24 = vector.shape_cast %21 : vector<16x256xbf16> to vector<1x16x256xbf16>
    tpu.vector_store %arg8[%c1, %c0_17, %c0_18], %24 {strides = array<i32>} : memref<2x16x256xbf16, #tpu.memory_space<vmem>>, vector<1x16x256xbf16>,
    %c0_19 = arith.constant 0 : index
    %c0_20 = arith.constant 0 : index
    %25 = vector.load %arg6[%c0_19, %c0_20] : memref<256x128xbf16, #tpu.memory_space<vmem>>, vector<256x128xbf16>
    %cst_21 = arith.constant dense<0.000000e+00> : vector<16x128xf32>
    %26 = tpu.matmul %21, %25, %cst_21 {dimension_numbers = #tpu.dot_dimension_numbers<[1], [0], [0], [1], [0, 0, 1, 1], [], []>} : vector<16x256xbf16>, vector<256x128xbf16>, vector<16x128xf32> -> vector<16x128xf32>
    %c0_22 = arith.constant 0 : index
    %c0_23 = arith.constant 0 : index
    %27 = vector.load %arg7[%c0_22, %c0_23] : memref<1x128xf32, #tpu.memory_space<vmem>>, vector<1x128xf32>
    %28 = vector.broadcast %27 : vector<1x128xf32> to vector<16x128xf32>
    %29 = arith.addf %26, %28 : vector<16x128xf32>
    %c0_24 = arith.constant 0 : index
    %c0_25 = arith.constant 0 : index
    %30 = vector.load %arg9[%c0_24, %c0_25] : memref<16x128xf32, #tpu.memory_space<vmem>>, vector<16x128xf32>
    tpu.vector_store %arg9[%c0_24, %c0_25], %29 {strides = array<i32>} : memref<16x128xf32, #tpu.memory_space<vmem>>, vector<16x128xf32>,
    return
  }
  func.func @transform_0(%arg0: i32) -> (i32, i32) {
    %c0_i32 = arith.constant 0 : i32
    %c0_i32_0 = arith.constant 0 : i32
    return %arg0, %c0_i32 : i32, i32
  }
  func.func @transform_1(%arg0: i32) -> (i32, i32) {
    %c0_i32 = arith.constant 0 : i32
    %c0_i32_0 = arith.constant 0 : i32
    %c0_i32_1 = arith.constant 0 : i32
    return %c0_i32, %c0_i32_0 : i32, i32
  }
  func.func @transform_2(%arg0: i32) -> (i32, i32) {
    %c0_i32 = arith.constant 0 : i32
    %c0_i32_0 = arith.constant 0 : i32
    %c0_i32_1 = arith.constant 0 : i32
    return %c0_i32, %c0_i32_0 : i32, i32
  }
  func.func @transform_3(%arg0: i32) -> (i32, i32, i32) {
    %c0_i32 = arith.constant 0 : i32
    %c0_i32_0 = arith.constant 0 : i32
    %c0_i32_1 = arith.constant 0 : i32
    %c0_i32_2 = arith.constant 0 : i32
    return %c0_i32, %c0_i32_0, %c0_i32_1 : i32, i32, i32
  }
  func.func @transform_4(%arg0: i32) -> (i32, i32, i32) {
    %c0_i32 = arith.constant 0 : i32
    %c0_i32_0 = arith.constant 0 : i32
    %c0_i32_1 = arith.constant 0 : i32
    %c0_i32_2 = arith.constant 0 : i32
    return %c0_i32, %c0_i32_0, %c0_i32_1 : i32, i32, i32
  }
  func.func @transform_5(%arg0: i32) -> (i32, i32) {
    %c0_i32 = arith.constant 0 : i32
    %c0_i32_0 = arith.constant 0 : i32
    %c0_i32_1 = arith.constant 0 : i32
    return %c0_i32, %c0_i32_0 : i32, i32
  }
  func.func @transform_6(%arg0: i32) -> (i32, i32) {
    %c0_i32 = arith.constant 0 : i32
    %c0_i32_0 = arith.constant 0 : i32
    %c0_i32_1 = arith.constant 0 : i32
    return %c0_i32, %c0_i32_0 : i32, i32
  }
  func.func @transform_7(%arg0: i32) -> (i32, i32, i32) {
    %c0_i32 = arith.constant 0 : i32
    %c0_i32_0 = arith.constant 0 : i32
    %c0_i32_1 = arith.constant 0 : i32
    return %c0_i32, %arg0, %c0_i32_0 : i32, i32, i32
  }
  func.func @transform_8(%arg0: i32) -> (i32, i32) {
    %c0_i32 = arith.constant 0 : i32
    %c0_i32_0 = arith.constant 0 : i32
    return %arg0, %c0_i32 : i32, i32
  }
}

</mosaic_0001>

<llo_original>
// kernel: tpu_custom_call.1
$region0: #{tpu_custom_call.1}
  #allocation0 [shape = 'u32[]', space=smem, size = 0x4, offset = 0x4, fixed_abs, tag = 'smem constant byte address 0x4 - core index']
  #allocation1 [shape = 'u32[72,128]{1,0:T(1,128)}', space=vmem, size = 0x9000, scoped, tag = 'internal scratch']
  %s0 = inlined_call_operand.hbm [shape: bf16[16,896], index: 0, kind: input, shape index: {}]
  %s1 = inlined_call_operand.hbm [shape: bf16[896,256], index: 1, kind: input, shape index: {}]
  %s2 = inlined_call_operand.hbm [shape: f32[1,256], index: 2, kind: input, shape index: {}]
  %s3 = inlined_call_operand.hbm [shape: bf16[1,256,256], index: 3, kind: input, shape index: {}]
  %s4 = inlined_call_operand.vmem [shape: f32[1,1,256], index: 4, kind: input, shape index: {}]
  %s5 = inlined_call_operand.hbm [shape: bf16[256,128], index: 5, kind: input, shape index: {}]
  %s6 = inlined_call_operand.vmem [shape: f32[1,128], index: 6, kind: input, shape index: {}]
  %s7 = inlined_call_operand.hbm [shape: bf16[2,16,256], index: 7, kind: output, shape index: {0}]
  %s8 = inlined_call_operand.hbm [shape: f32[16,128], index: 8, kind: output, shape index: {1}]
  %9 = xla_tuple %s7, %s8
  %s10 = sld [smem:[#allocation0]]
  $region66: #{tpu_custom_call.1} parent=0
    _
  %s12 = ssub.s32 1, %s10
  %s13 = scalar_select 0, %s12, %s10
  $region1: #{tpu_custom_call.1} parent=0
    #allocation2 [shape = 'u8[28672]{0}', space=vmem, size = 0x7000, scoped, tag = 'input window, operand 0, single buffered']
    #allocation3 [shape = 's32[1]{0}', space=sflag, size = 0x4, scoped, tag = 'scoped memory for tpu_custom_call.1']
    #allocation4 [shape = 's32[1]{0}', space=sflag, size = 0x4, scoped, tag = 'scoped memory for tpu_custom_call.1']
    #allocation5 [shape = 'u8[458752]{0}', space=vmem, size = 0x70000, scoped, tag = 'input window, operand 1, single buffered']
    #allocation6 [shape = 's32[1]{0}', space=sflag, size = 0x4, scoped, tag = 'scoped memory for tpu_custom_call.1']
    #allocation7 [shape = 'u8[1024]{0}', space=vmem, size = 0x400, scoped, tag = 'input window, operand 2, single buffered']
    #allocation8 [shape = 'u8[131072]{0}', space=vmem, size = 0x20000, scoped, tag = 'input window, operand 3, single buffered']
    #allocation9 [shape = 's32[1]{0}', space=sflag, size = 0x4, scoped, tag = 'scoped memory for tpu_custom_call.1']
    #allocation10 [shape = 'u8[65536]{0}', space=vmem, size = 0x10000, scoped, tag = 'input window, operand 5, single buffered']
    #allocation11 [shape = 'u8[16384]{0}', space=vmem, size = 0x4000, scoped, tag = 'output window, operand 0, single buffered']
    #allocation12 [shape = 'u8[8192]{0}', space=vmem, size = 0x2000, scoped, tag = 'output window, operand 1, single buffered']
    #allocation13 [shape = 's32[1]{0}', space=sflag, size = 0x4, scoped, tag = 'scoped memory for tpu_custom_call.1']
    %14 = vsyncpa [#allocation3], 0
    %15 = vsyncpa [#allocation6], 0
    %16 = vsyncpa [#allocation9], 0
    %17 = vsyncpa [#allocation4], 0
    %18 = vsyncpa [#allocation13], 0
    // Predicated region
    $region2: #{tpu_custom_call.1} parent=1 // pred_check
      _
    $region3: #{tpu_custom_call.1} parent=1 // pred_check_branch
      %20 = sbr.rel (0) target = $region5
    $region4: #{tpu_custom_call.1} parent=1 // pred_region
      %22 = vsyncadd [#allocation3], 0
      %s23 = sshll.u32 %s0, 4
      %s24 = int_to_ptr.hbm [resolvable:$true] %s23
      %s25 = sshll.u32 [#allocation2], 4
      %s26 = int_to_ptr.vmem [resolvable:$true] %s25
      %31 = dma.hbm_to_vmem [thread:$0]  %s24, 896, %s26, [#allocation3], 448, 448, 28
    $region5: #{tpu_custom_call.1} parent=1 // pred_fallthru
      _
    // Predicated region
    $region6: #{tpu_custom_call.1} parent=1 // pred_check
      _
    $region7: #{tpu_custom_call.1} parent=1 // pred_check_branch
      %33 = sbr.rel (0) target = $region9
    $region8: #{tpu_custom_call.1} parent=1 // pred_region
      %35 = vsyncadd [#allocation6], 0
      %s36 = sshll.u32 %s1, 4
      %s37 = int_to_ptr.hbm [resolvable:$true] %s36
      %s38 = sshll.u32 [#allocation5], 4
      %s39 = int_to_ptr.vmem [resolvable:$true] %s38
      %44 = dma.hbm_to_vmem [thread:$0]  %s37, 14336, %s39, [#allocation6], 128, 128, 8
    $region9: #{tpu_custom_call.1} parent=1 // pred_fallthru
      _
    // Predicated region
    $region10: #{tpu_custom_call.1} parent=1 // pred_check
      _
    $region11: #{tpu_custom_call.1} parent=1 // pred_check_branch
      %46 = sbr.rel (0) target = $region13
    $region12: #{tpu_custom_call.1} parent=1 // pred_region
      %48 = vsyncadd [#allocation6], 0
      %s50 = sshll.u32 %s2, 4
      %s51 = int_to_ptr.hbm [resolvable:$true] %s50
      %s52 = sshll.u32 [#allocation7], 4
      %s53 = int_to_ptr.vmem [resolvable:$true] %s52
      %55 = dma.hbm_to_vmem [thread:$0]  %s51, 32, %s53, [#allocation6]
    $region13: #{tpu_custom_call.1} parent=1 // pred_fallthru
      _
    // Predicated region
    $region14: #{tpu_custom_call.1} parent=1 // pred_check
      _
    $region15: #{tpu_custom_call.1} parent=1 // pred_check_branch
      %57 = sbr.rel (0) target = $region17
    $region16: #{tpu_custom_call.1} parent=1 // pred_region
      %59 = vsyncadd [#allocation9], 0
      %s60 = sshll.u32 %s3, 4
      %s61 = int_to_ptr.hbm [resolvable:$true] %s60
      %s62 = sshll.u32 [#allocation8], 4
      %s63 = int_to_ptr.vmem [resolvable:$true] %s62
      %68 = dma.hbm_to_vmem [thread:$0]  %s61, 4096, %s63, [#allocation9], 128, 128, 8
    $region17: #{tpu_custom_call.1} parent=1 // pred_fallthru
      _
    // Predicated region
    $region18: #{tpu_custom_call.1} parent=1 // pred_check
      _
    $region19: #{tpu_custom_call.1} parent=1 // pred_check_branch
      %70 = sbr.rel (0) target = $region21
    $region20: #{tpu_custom_call.1} parent=1 // pred_region
      _
    $region21: #{tpu_custom_call.1} parent=1 // pred_fallthru
      _
    // Predicated region
    $region22: #{tpu_custom_call.1} parent=1 // pred_check
      _
    $region23: #{tpu_custom_call.1} parent=1 // pred_check_branch
      %72 = sbr.rel (0) target = $region25
    $region24: #{tpu_custom_call.1} parent=1 // pred_region
      %74 = vsyncadd [#allocation9], 0
      %s75 = sshll.u32 %s5, 4
      %s76 = int_to_ptr.hbm [resolvable:$true] %s75
      %s77 = sshll.u32 [#allocation10], 4
      %s78 = int_to_ptr.vmem [resolvable:$true] %s77
      %83 = dma.hbm_to_vmem [thread:$0]  %s76, 2048, %s78, [#allocation9], 64, 64, 4
    $region25: #{tpu_custom_call.1} parent=1 // pred_fallthru
      _
    // Predicated region
    $region26: #{tpu_custom_call.1} parent=1 // pred_check
      _
    $region27: #{tpu_custom_call.1} parent=1 // pred_check_branch
      %85 = sbr.rel (0) target = $region29
    $region28: #{tpu_custom_call.1} parent=1 // pred_region
      _
    $region29: #{tpu_custom_call.1} parent=1 // pred_fallthru
      _
    // Predicated region
    $region30: #{tpu_custom_call.1} parent=1 // pred_check
      _
    $region31: #{tpu_custom_call.1} parent=1 // pred_check_branch
      %87 = sbr.rel (0) target = $region33
    $region32: #{tpu_custom_call.1} parent=1 // pred_region
      %89 = dma.done [#allocation3], 896
    $region33: #{tpu_custom_call.1} parent=1 // pred_fallthru
      _
    // Predicated region
    $region34: #{tpu_custom_call.1} parent=1 // pred_check
      _
    $region35: #{tpu_custom_call.1} parent=1 // pred_check_branch
      %91 = sbr.rel (0) target = $region37
    $region36: #{tpu_custom_call.1} parent=1 // pred_region
      %93 = dma.done [#allocation6], 14336
    $region37: #{tpu_custom_call.1} parent=1 // pred_fallthru
      _
    // Predicated region
    $region38: #{tpu_custom_call.1} parent=1 // pred_check
      _
    $region39: #{tpu_custom_call.1} parent=1 // pred_check_branch
      %95 = sbr.rel (0) target = $region41
    $region40: #{tpu_custom_call.1} parent=1 // pred_region
      %97 = dma.done [#allocation6], 32
    $region41: #{tpu_custom_call.1} parent=1 // pred_fallthru
      _
    // Predicated region
    $region42: #{tpu_custom_call.1} parent=1 // pred_check
      _
    $region43: #{tpu_custom_call.1} parent=1 // pred_check_branch
      %99 = sbr.rel (0) target = $region45
    $region44: #{tpu_custom_call.1} parent=1 // pred_region
      %101 = dma.done [#allocation9], 4096
    $region45: #{tpu_custom_call.1} parent=1 // pred_fallthru
      _
    // Predicated region
    $region46: #{tpu_custom_call.1} parent=1 // pred_check
      _
    $region47: #{tpu_custom_call.1} parent=1 // pred_check_branch
      %103 = sbr.rel (0) target = $region49
    $region48: #{tpu_custom_call.1} parent=1 // pred_region
      %105 = dma.done [#allocation9], 2048
    $region49: #{tpu_custom_call.1} parent=1 // pred_fallthru
      _
    %v106 = vld [vmem:[#allocation2] sm:$0xff]
    %v107 = vld [vmem:[#allocation2 + $0x8] sm:$0xff]
    %v108 = vld [vmem:[#allocation2 + $0x10] sm:$0xff]
    %v109 = vld [vmem:[#allocation2 + $0x18] sm:$0xf]
    %v110 = vld [vmem:[#allocation2 + $0x1c] sm:$0xff]
    %v111 = vld [vmem:[#allocation2 + $0x24] sm:$0xff]
    %v112 = vld [vmem:[#allocation2 + $0x2c] sm:$0xff]
    %v113 = vld [vmem:[#allocation2 + $0x34] sm:$0xf]
    %v114 = vld [vmem:[#allocation5] sm:$0xff]
    %v115 = vld [vmem:[#allocation5 + $0x8] sm:$0xff]
    %v116 = vld [vmem:[#allocation5 + $0x10] sm:$0xff]
    %v117 = vld [vmem:[#allocation5 + $0x18] sm:$0xff]
    %v118 = vld [vmem:[#allocation5 + $0x20] sm:$0xff]
    %v119 = vld [vmem:[#allocation5 + $0x28] sm:$0xff]
    %v120 = vld [vmem:[#allocation5 + $0x30] sm:$0xff]
    %v121 = vld [vmem:[#allocation5 + $0x38] sm:$0xff]
    %v122 = vld [vmem:[#allocation5 + $0x40] sm:$0xff]
    %v123 = vld [vmem:[#allocation5 + $0x48] sm:$0xff]
    %v124 = vld [vmem:[#allocation5 + $0x50] sm:$0xff]
    %v125 = vld [vmem:[#allocation5 + $0x58] sm:$0xff]
    %v126 = vld [vmem:[#allocation5 + $0x60] sm:$0xff]
    %v127 = vld [vmem:[#allocation5 + $0x68] sm:$0xff]
    %v128 = vld [vmem:[#allocation5 + $0x70] sm:$0xff]
    %v129 = vld [vmem:[#allocation5 + $0x78] sm:$0xff]
    %v130 = vld [vmem:[#allocation5 + $0x80] sm:$0xff]
    %v131 = vld [vmem:[#allocation5 + $0x88] sm:$0xff]
    %v132 = vld [vmem:[#allocation5 + $0x90] sm:$0xff]
    %v133 = vld [vmem:[#allocation5 + $0x98] sm:$0xff]
    %v134 = vld [vmem:[#allocation5 + $0xa0] sm:$0xff]
    %v135 = vld [vmem:[#allocation5 + $0xa8] sm:$0xff]
    %v136 = vld [vmem:[#allocation5 + $0xb0] sm:$0xff]
    %v137 = vld [vmem:[#allocation5 + $0xb8] sm:$0xff]
    %v138 = vld [vmem:[#allocation5 + $0xc0] sm:$0xff]
    %v139 = vld [vmem:[#allocation5 + $0xc8] sm:$0xff]
    %v140 = vld [vmem:[#allocation5 + $0xd0] sm:$0xff]
    %v141 = vld [vmem:[#allocation5 + $0xd8] sm:$0xff]
    %v142 = vld [vmem:[#allocation5 + $0xe0] sm:$0xff]
    %v143 = vld [vmem:[#allocation5 + $0xe8] sm:$0xff]
    %v144 = vld [vmem:[#allocation5 + $0xf0] sm:$0xff]
    %v145 = vld [vmem:[#allocation5 + $0xf8] sm:$0xff]
    %v146 = vld [vmem:[#allocation5 + $0x100] sm:$0xff]
    %v147 = vld [vmem:[#allocation5 + $0x108] sm:$0xff]
    %v148 = vld [vmem:[#allocation5 + $0x110] sm:$0xff]
    %v149 = vld [vmem:[#allocation5 + $0x118] sm:$0xff]
    %v150 = vld [vmem:[#allocation5 + $0x120] sm:$0xff]
    %v151 = vld [vmem:[#allocation5 + $0x128] sm:$0xff]
    %v152 = vld [vmem:[#allocation5 + $0x130] sm:$0xff]
    %v153 = vld [vmem:[#allocation5 + $0x138] sm:$0xff]
    %v154 = vld [vmem:[#allocation5 + $0x140] sm:$0xff]
    %v155 = vld [vmem:[#allocation5 + $0x148] sm:$0xff]
    %v156 = vld [vmem:[#allocation5 + $0x150] sm:$0xff]
    %v157 = vld [vmem:[#allocation5 + $0x158] sm:$0xff]
    %v158 = vld [vmem:[#allocation5 + $0x160] sm:$0xff]
    %v159 = vld [vmem:[#allocation5 + $0x168] sm:$0xff]
    %v160 = vld [vmem:[#allocation5 + $0x170] sm:$0xff]
    %v161 = vld [vmem:[#allocation5 + $0x178] sm:$0xff]
    %v162 = vld [vmem:[#allocation5 + $0x180] sm:$0xff]
    %v163 = vld [vmem:[#allocation5 + $0x188] sm:$0xff]
    %v164 = vld [vmem:[#allocation5 + $0x190] sm:$0xff]
    %v165 = vld [vmem:[#allocation5 + $0x198] sm:$0xff]
    %v166 = vld [vmem:[#allocation5 + $0x1a0] sm:$0xff]
    %v167 = vld [vmem:[#allocation5 + $0x1a8] sm:$0xff]
    %v168 = vld [vmem:[#allocation5 + $0x1b0] sm:$0xff]
    %v169 = vld [vmem:[#allocation5 + $0x1b8] sm:$0xff]
    %v170 = vld [vmem:[#allocation5 + $0x1c0] sm:$0xff]
    %v171 = vld [vmem:[#allocation5 + $0x1c8] sm:$0xff]
    %v172 = vld [vmem:[#allocation5 + $0x1d0] sm:$0xff]
    %v173 = vld [vmem:[#allocation5 + $0x1d8] sm:$0xff]
    %v174 = vld [vmem:[#allocation5 + $0x1e0] sm:$0xff]
    %v175 = vld [vmem:[#allocation5 + $0x1e8] sm:$0xff]
    %v176 = vld [vmem:[#allocation5 + $0x1f0] sm:$0xff]
    %v177 = vld [vmem:[#allocation5 + $0x1f8] sm:$0xff]
    %v178 = vld [vmem:[#allocation5 + $0x200] sm:$0xff]
    %v179 = vld [vmem:[#allocation5 + $0x208] sm:$0xff]
    %v180 = vld [vmem:[#allocation5 + $0x210] sm:$0xff]
    %v181 = vld [vmem:[#allocation5 + $0x218] sm:$0xff]
    %v182 = vld [vmem:[#allocation5 + $0x220] sm:$0xff]
    %v183 = vld [vmem:[#allocation5 + $0x228] sm:$0xff]
    %v184 = vld [vmem:[#allocation5 + $0x230] sm:$0xff]
    %v185 = vld [vmem:[#allocation5 + $0x238] sm:$0xff]
    %v186 = vld [vmem:[#allocation5 + $0x240] sm:$0xff]
    %v187 = vld [vmem:[#allocation5 + $0x248] sm:$0xff]
    %v188 = vld [vmem:[#allocation5 + $0x250] sm:$0xff]
    %v189 = vld [vmem:[#allocation5 + $0x258] sm:$0xff]
    %v190 = vld [vmem:[#allocation5 + $0x260] sm:$0xff]
    %v191 = vld [vmem:[#allocation5 + $0x268] sm:$0xff]
    %v192 = vld [vmem:[#allocation5 + $0x270] sm:$0xff]
    %v193 = vld [vmem:[#allocation5 + $0x278] sm:$0xff]
    %v194 = vld [vmem:[#allocation5 + $0x280] sm:$0xff]
    %v195 = vld [vmem:[#allocation5 + $0x288] sm:$0xff]
    %v196 = vld [vmem:[#allocation5 + $0x290] sm:$0xff]
    %v197 = vld [vmem:[#allocation5 + $0x298] sm:$0xff]
    %v198 = vld [vmem:[#allocation5 + $0x2a0] sm:$0xff]
    %v199 = vld [vmem:[#allocation5 + $0x2a8] sm:$0xff]
    %v200 = vld [vmem:[#allocation5 + $0x2b0] sm:$0xff]
    %v201 = vld [vmem:[#allocation5 + $0x2b8] sm:$0xff]
    %v202 = vld [vmem:[#allocation5 + $0x2c0] sm:$0xff]
    %v203 = vld [vmem:[#allocation5 + $0x2c8] sm:$0xff]
    %v204 = vld [vmem:[#allocation5 + $0x2d0] sm:$0xff]
    %v205 = vld [vmem:[#allocation5 + $0x2d8] sm:$0xff]
    %v206 = vld [vmem:[#allocation5 + $0x2e0] sm:$0xff]
    %v207 = vld [vmem:[#allocation5 + $0x2e8] sm:$0xff]
    %v208 = vld [vmem:[#allocation5 + $0x2f0] sm:$0xff]
    %v209 = vld [vmem:[#allocation5 + $0x2f8] sm:$0xff]
    %v210 = vld [vmem:[#allocation5 + $0x300] sm:$0xff]
    %v211 = vld [vmem:[#allocation5 + $0x308] sm:$0xff]
    %v212 = vld [vmem:[#allocation5 + $0x310] sm:$0xff]
    %v213 = vld [vmem:[#allocation5 + $0x318] sm:$0xff]
    %v214 = vld [vmem:[#allocation5 + $0x320] sm:$0xff]
    %v215 = vld [vmem:[#allocation5 + $0x328] sm:$0xff]
    %v216 = vld [vmem:[#allocation5 + $0x330] sm:$0xff]
    %v217 = vld [vmem:[#allocation5 + $0x338] sm:$0xff]
    %v218 = vld [vmem:[#allocation5 + $0x340] sm:$0xff]
    %v219 = vld [vmem:[#allocation5 + $0x348] sm:$0xff]
    %v220 = vld [vmem:[#allocation5 + $0x350] sm:$0xff]
    %v221 = vld [vmem:[#allocation5 + $0x358] sm:$0xff]
    %v222 = vld [vmem:[#allocation5 + $0x360] sm:$0xff]
    %v223 = vld [vmem:[#allocation5 + $0x368] sm:$0xff]
    %v224 = vld [vmem:[#allocation5 + $0x370] sm:$0xff]
    %v225 = vld [vmem:[#allocation5 + $0x378] sm:$0xff]
    %v226 = vld [vmem:[#allocation7] sm:$0x3]
    %v228 = vperm.slane %v226, 0
    %v229 = vperm.slane %v226, 1
    %v240 = vunpack.c.l.b16 %v106
    %v241 = vunpack.c.h.b16 %v106
    %v242 = vunpack.c.l.b16 %v107
    %v243 = vunpack.c.h.b16 %v107
    %v244 = vunpack.c.l.b16 %v108
    %v245 = vunpack.c.h.b16 %v108
    %v246 = vunpack.c.l.b16 %v109
    %v247 = vunpack.c.l.b16 %v110
    %v248 = vunpack.c.h.b16 %v110
    %v249 = vunpack.c.l.b16 %v111
    %v250 = vunpack.c.h.b16 %v111
    %v251 = vunpack.c.l.b16 %v112
    %v252 = vunpack.c.h.b16 %v112
    %v253 = vunpack.c.l.b16 %v113
    %v254 = vpack.c.b16 %v247, %v240
    %v255 = vpack.c.b16 %v248, %v241
    %v256 = vpack.c.b16 %v249, %v242
    %v257 = vpack.c.b16 %v250, %v243
    %v258 = vpack.c.b16 %v251, %v244
    %v259 = vpack.c.b16 %v252, %v245
    %v260 = vpack.c.b16 %v253, %v246
    %v380 = vunpack.c.l.b16 %v114
    %v381 = vunpack.c.h.b16 %v114
    %v382 = vunpack.c.l.b16 %v115
    %v383 = vunpack.c.h.b16 %v115
    %v384 = vunpack.c.l.b16 %v116
    %v385 = vunpack.c.h.b16 %v116
    %v386 = vunpack.c.l.b16 %v117
    %v387 = vunpack.c.h.b16 %v117
    %v388 = vunpack.c.l.b16 %v118
    %v389 = vunpack.c.h.b16 %v118
    %v390 = vunpack.c.l.b16 %v119
    %v391 = vunpack.c.h.b16 %v119
    %v392 = vunpack.c.l.b16 %v120
    %v393 = vunpack.c.h.b16 %v120
    %v394 = vunpack.c.l.b16 %v121
    %v395 = vunpack.c.h.b16 %v121
    %v396 = vunpack.c.l.b16 %v122
    %v397 = vunpack.c.h.b16 %v122
    %v398 = vunpack.c.l.b16 %v123
    %v399 = vunpack.c.h.b16 %v123
    %v400 = vunpack.c.l.b16 %v124
    %v401 = vunpack.c.h.b16 %v124
    %v402 = vunpack.c.l.b16 %v125
    %v403 = vunpack.c.h.b16 %v125
    %v404 = vunpack.c.l.b16 %v126
    %v405 = vunpack.c.h.b16 %v126
    %v406 = vunpack.c.l.b16 %v127
    %v407 = vunpack.c.h.b16 %v127
    %v408 = vunpack.c.l.b16 %v128
    %v409 = vunpack.c.h.b16 %v128
    %v410 = vunpack.c.l.b16 %v129
    %v411 = vunpack.c.h.b16 %v129
    %v412 = vunpack.c.l.b16 %v130
    %v413 = vunpack.c.h.b16 %v130
    %v414 = vunpack.c.l.b16 %v131
    %v415 = vunpack.c.h.b16 %v131
    %v416 = vunpack.c.l.b16 %v132
    %v417 = vunpack.c.h.b16 %v132
    %v418 = vunpack.c.l.b16 %v133
    %v419 = vunpack.c.h.b16 %v133
    %v420 = vunpack.c.l.b16 %v134
    %v421 = vunpack.c.h.b16 %v134
    %v422 = vunpack.c.l.b16 %v135
    %v423 = vunpack.c.h.b16 %v135
    %v424 = vunpack.c.l.b16 %v136
    %v425 = vunpack.c.h.b16 %v136
    %v426 = vunpack.c.l.b16 %v137
    %v427 = vunpack.c.h.b16 %v137
    %v428 = vunpack.c.l.b16 %v138
    %v429 = vunpack.c.h.b16 %v138
    %v430 = vunpack.c.l.b16 %v139
    %v431 = vunpack.c.h.b16 %v139
    %v432 = vunpack.c.l.b16 %v140
    %v433 = vunpack.c.h.b16 %v140
    %v434 = vunpack.c.l.b16 %v141
    %v435 = vunpack.c.h.b16 %v141
    %v436 = vunpack.c.l.b16 %v142
    %v437 = vunpack.c.h.b16 %v142
    %v438 = vunpack.c.l.b16 %v143
    %v439 = vunpack.c.h.b16 %v143
    %v440 = vunpack.c.l.b16 %v144
    %v441 = vunpack.c.h.b16 %v144
    %v442 = vunpack.c.l.b16 %v145
    %v443 = vunpack.c.h.b16 %v145
    %v444 = vunpack.c.l.b16 %v146
    %v445 = vunpack.c.h.b16 %v146
    %v446 = vunpack.c.l.b16 %v147
    %v447 = vunpack.c.h.b16 %v147
    %v448 = vunpack.c.l.b16 %v148
    %v449 = vunpack.c.h.b16 %v148
    %v450 = vunpack.c.l.b16 %v149
    %v451 = vunpack.c.h.b16 %v149
    %v452 = vunpack.c.l.b16 %v150
    %v453 = vunpack.c.h.b16 %v150
    %v454 = vunpack.c.l.b16 %v151
    %v455 = vunpack.c.h.b16 %v151
    %v456 = vunpack.c.l.b16 %v152
    %v457 = vunpack.c.h.b16 %v152
    %v458 = vunpack.c.l.b16 %v153
    %v459 = vunpack.c.h.b16 %v153
    %v460 = vunpack.c.l.b16 %v154
    %v461 = vunpack.c.h.b16 %v154
    %v462 = vunpack.c.l.b16 %v155
    %v463 = vunpack.c.h.b16 %v155
    %v464 = vunpack.c.l.b16 %v156
    %v465 = vunpack.c.h.b16 %v156
    %v466 = vunpack.c.l.b16 %v157
    %v467 = vunpack.c.h.b16 %v157
    %v468 = vunpack.c.l.b16 %v158
    %v469 = vunpack.c.h.b16 %v158
    %v470 = vunpack.c.l.b16 %v159
    %v471 = vunpack.c.h.b16 %v159
    %v472 = vunpack.c.l.b16 %v160
    %v473 = vunpack.c.h.b16 %v160
    %v474 = vunpack.c.l.b16 %v161
    %v475 = vunpack.c.h.b16 %v161
    %v476 = vunpack.c.l.b16 %v162
    %v477 = vunpack.c.h.b16 %v162
    %v478 = vunpack.c.l.b16 %v163
    %v479 = vunpack.c.h.b16 %v163
    %v480 = vunpack.c.l.b16 %v164
    %v481 = vunpack.c.h.b16 %v164
    %v482 = vunpack.c.l.b16 %v165
    %v483 = vunpack.c.h.b16 %v165
    %v484 = vunpack.c.l.b16 %v166
    %v485 = vunpack.c.h.b16 %v166
    %v486 = vunpack.c.l.b16 %v167
    %v487 = vunpack.c.h.b16 %v167
    %v488 = vunpack.c.l.b16 %v168
    %v489 = vunpack.c.h.b16 %v168
    %v490 = vunpack.c.l.b16 %v169
    %v491 = vunpack.c.h.b16 %v169
    %v492 = vunpack.c.l.b16 %v170
    %v493 = vunpack.c.h.b16 %v170
    %v494 = vunpack.c.l.b16 %v171
    %v495 = vunpack.c.h.b16 %v171
    %v496 = vunpack.c.l.b16 %v172
    %v497 = vunpack.c.h.b16 %v172
    %v498 = vunpack.c.l.b16 %v173
    %v499 = vunpack.c.h.b16 %v173
    %v500 = vunpack.c.l.b16 %v174
    %v501 = vunpack.c.h.b16 %v174
    %v502 = vunpack.c.l.b16 %v175
    %v503 = vunpack.c.h.b16 %v175
    %v504 = vunpack.c.l.b16 %v176
    %v505 = vunpack.c.h.b16 %v176
    %v506 = vunpack.c.l.b16 %v177
    %v507 = vunpack.c.h.b16 %v177
    %v508 = vunpack.c.l.b16 %v178
    %v509 = vunpack.c.h.b16 %v178
    %v510 = vunpack.c.l.b16 %v179
    %v511 = vunpack.c.h.b16 %v179
    %v512 = vunpack.c.l.b16 %v180
    %v513 = vunpack.c.h.b16 %v180
    %v514 = vunpack.c.l.b16 %v181
    %v515 = vunpack.c.h.b16 %v181
    %v516 = vunpack.c.l.b16 %v182
    %v517 = vunpack.c.h.b16 %v182
    %v518 = vunpack.c.l.b16 %v183
    %v519 = vunpack.c.h.b16 %v183
    %v520 = vunpack.c.l.b16 %v184
    %v521 = vunpack.c.h.b16 %v184
    %v522 = vunpack.c.l.b16 %v185
    %v523 = vunpack.c.h.b16 %v185
    %v524 = vunpack.c.l.b16 %v186
    %v525 = vunpack.c.h.b16 %v186
    %v526 = vunpack.c.l.b16 %v187
    %v527 = vunpack.c.h.b16 %v187
    %v528 = vunpack.c.l.b16 %v188
    %v529 = vunpack.c.h.b16 %v188
    %v530 = vunpack.c.l.b16 %v189
    %v531 = vunpack.c.h.b16 %v189
    %v532 = vunpack.c.l.b16 %v190
    %v533 = vunpack.c.h.b16 %v190
    %v534 = vunpack.c.l.b16 %v191
    %v535 = vunpack.c.h.b16 %v191
    %v536 = vunpack.c.l.b16 %v192
    %v537 = vunpack.c.h.b16 %v192
    %v538 = vunpack.c.l.b16 %v193
    %v539 = vunpack.c.h.b16 %v193
    %v540 = vunpack.c.l.b16 %v194
    %v541 = vunpack.c.h.b16 %v194
    %v542 = vunpack.c.l.b16 %v195
    %v543 = vunpack.c.h.b16 %v195
    %v544 = vunpack.c.l.b16 %v196
    %v545 = vunpack.c.h.b16 %v196
    %v546 = vunpack.c.l.b16 %v197
    %v547 = vunpack.c.h.b16 %v197
    %v548 = vunpack.c.l.b16 %v198
    %v549 = vunpack.c.h.b16 %v198
    %v550 = vunpack.c.l.b16 %v199
    %v551 = vunpack.c.h.b16 %v199
    %v552 = vunpack.c.l.b16 %v200
    %v553 = vunpack.c.h.b16 %v200
    %v554 = vunpack.c.l.b16 %v201
    %v555 = vunpack.c.h.b16 %v201
    %v556 = vunpack.c.l.b16 %v202
    %v557 = vunpack.c.h.b16 %v202
    %v558 = vunpack.c.l.b16 %v203
    %v559 = vunpack.c.h.b16 %v203
    %v560 = vunpack.c.l.b16 %v204
    %v561 = vunpack.c.h.b16 %v204
    %v562 = vunpack.c.l.b16 %v205
    %v563 = vunpack.c.h.b16 %v205
    %v564 = vunpack.c.l.b16 %v206
    %v565 = vunpack.c.h.b16 %v206
    %v566 = vunpack.c.l.b16 %v207
    %v567 = vunpack.c.h.b16 %v207
    %v568 = vunpack.c.l.b16 %v208
    %v569 = vunpack.c.h.b16 %v208
    %v570 = vunpack.c.l.b16 %v209
    %v571 = vunpack.c.h.b16 %v209
    %v572 = vunpack.c.l.b16 %v210
    %v573 = vunpack.c.h.b16 %v210
    %v574 = vunpack.c.l.b16 %v211
    %v575 = vunpack.c.h.b16 %v211
    %v576 = vunpack.c.l.b16 %v212
    %v577 = vunpack.c.h.b16 %v212
    %v578 = vunpack.c.l.b16 %v213
    %v579 = vunpack.c.h.b16 %v213
    %v580 = vunpack.c.l.b16 %v214
    %v581 = vunpack.c.h.b16 %v214
    %v582 = vunpack.c.l.b16 %v215
    %v583 = vunpack.c.h.b16 %v215
    %v584 = vunpack.c.l.b16 %v216
    %v585 = vunpack.c.h.b16 %v216
    %v586 = vunpack.c.l.b16 %v217
    %v587 = vunpack.c.h.b16 %v217
    %v588 = vunpack.c.l.b16 %v218
    %v589 = vunpack.c.h.b16 %v218
    %v590 = vunpack.c.l.b16 %v219
    %v591 = vunpack.c.h.b16 %v219
    %v592 = vunpack.c.l.b16 %v220
    %v593 = vunpack.c.h.b16 %v220
    %v594 = vunpack.c.l.b16 %v221
    %v595 = vunpack.c.h.b16 %v221
    %v596 = vunpack.c.l.b16 %v222
    %v597 = vunpack.c.h.b16 %v222
    %v598 = vunpack.c.l.b16 %v223
    %v599 = vunpack.c.h.b16 %v223
    %v600 = vunpack.c.l.b16 %v224
    %v601 = vunpack.c.h.b16 %v224
    %v602 = vunpack.c.l.b16 %v225
    %v603 = vunpack.c.h.b16 %v225
    %v604 = vpack.c.b16 %v382, %v380
    %v605 = vpack.c.b16 %v383, %v381
    %v606 = vpack.c.b16 %v386, %v384
    %v607 = vpack.c.b16 %v387, %v385
    %v608 = vpack.c.b16 %v390, %v388
    %v609 = vpack.c.b16 %v391, %v389
    %v610 = vpack.c.b16 %v394, %v392
    %v611 = vpack.c.b16 %v395, %v393
    %v612 = vpack.c.b16 %v398, %v396
    %v613 = vpack.c.b16 %v399, %v397
    %v614 = vpack.c.b16 %v402, %v400
    %v615 = vpack.c.b16 %v403, %v401
    %v616 = vpack.c.b16 %v406, %v404
    %v617 = vpack.c.b16 %v407, %v405
    %v618 = vpack.c.b16 %v410, %v408
    %v619 = vpack.c.b16 %v411, %v409
    %v620 = vpack.c.b16 %v414, %v412
    %v621 = vpack.c.b16 %v415, %v413
    %v622 = vpack.c.b16 %v418, %v416
    %v623 = vpack.c.b16 %v419, %v417
    %v624 = vpack.c.b16 %v422, %v420
    %v625 = vpack.c.b16 %v423, %v421
    %v626 = vpack.c.b16 %v426, %v424
    %v627 = vpack.c.b16 %v427, %v425
    %v628 = vpack.c.b16 %v430, %v428
    %v629 = vpack.c.b16 %v431, %v429
    %v630 = vpack.c.b16 %v434, %v432
    %v631 = vpack.c.b16 %v435, %v433
    %v632 = vpack.c.b16 %v438, %v436
    %v633 = vpack.c.b16 %v439, %v437
    %v634 = vpack.c.b16 %v442, %v440
    %v635 = vpack.c.b16 %v443, %v441
    %v636 = vpack.c.b16 %v446, %v444
    %v637 = vpack.c.b16 %v447, %v445
    %v638 = vpack.c.b16 %v450, %v448
    %v639 = vpack.c.b16 %v451, %v449
    %v640 = vpack.c.b16 %v454, %v452
    %v641 = vpack.c.b16 %v455, %v453
    %v642 = vpack.c.b16 %v458, %v456
    %v643 = vpack.c.b16 %v459, %v457
    %v644 = vpack.c.b16 %v462, %v460
    %v645 = vpack.c.b16 %v463, %v461
    %v646 = vpack.c.b16 %v466, %v464
    %v647 = vpack.c.b16 %v467, %v465
    %v648 = vpack.c.b16 %v470, %v468
    %v649 = vpack.c.b16 %v471, %v469
    %v650 = vpack.c.b16 %v474, %v472
    %v651 = vpack.c.b16 %v475, %v473
    %v652 = vpack.c.b16 %v478, %v476
    %v653 = vpack.c.b16 %v479, %v477
    %v654 = vpack.c.b16 %v482, %v480
    %v655 = vpack.c.b16 %v483, %v481
    %v656 = vpack.c.b16 %v486, %v484
    %v657 = vpack.c.b16 %v487, %v485
    %v658 = vpack.c.b16 %v490, %v488
    %v659 = vpack.c.b16 %v491, %v489
    %v660 = vpack.c.b16 %v494, %v492
    %v661 = vpack.c.b16 %v495, %v493
    %v662 = vpack.c.b16 %v498, %v496
    %v663 = vpack.c.b16 %v499, %v497
    %v664 = vpack.c.b16 %v502, %v500
    %v665 = vpack.c.b16 %v503, %v501
    %v666 = vpack.c.b16 %v506, %v504
    %v667 = vpack.c.b16 %v507, %v505
    %v668 = vpack.c.b16 %v510, %v508
    %v669 = vpack.c.b16 %v511, %v509
    %v670 = vpack.c.b16 %v514, %v512
    %v671 = vpack.c.b16 %v515, %v513
    %v672 = vpack.c.b16 %v518, %v516
    %v673 = vpack.c.b16 %v519, %v517
    %v674 = vpack.c.b16 %v522, %v520
    %v675 = vpack.c.b16 %v523, %v521
    %v676 = vpack.c.b16 %v526, %v524
    %v677 = vpack.c.b16 %v527, %v525
    %v678 = vpack.c.b16 %v530, %v528
    %v679 = vpack.c.b16 %v531, %v529
    %v680 = vpack.c.b16 %v534, %v532
    %v681 = vpack.c.b16 %v535, %v533
    %v682 = vpack.c.b16 %v538, %v536
    %v683 = vpack.c.b16 %v539, %v537
    %v684 = vpack.c.b16 %v542, %v540
    %v685 = vpack.c.b16 %v543, %v541
    %v686 = vpack.c.b16 %v546, %v544
    %v687 = vpack.c.b16 %v547, %v545
    %v688 = vpack.c.b16 %v550, %v548
    %v689 = vpack.c.b16 %v551, %v549
    %v690 = vpack.c.b16 %v554, %v552
    %v691 = vpack.c.b16 %v555, %v553
    %v692 = vpack.c.b16 %v558, %v556
    %v693 = vpack.c.b16 %v559, %v557
    %v694 = vpack.c.b16 %v562, %v560
    %v695 = vpack.c.b16 %v563, %v561
    %v696 = vpack.c.b16 %v566, %v564
    %v697 = vpack.c.b16 %v567, %v565
    %v698 = vpack.c.b16 %v570, %v568
    %v699 = vpack.c.b16 %v571, %v569
    %v700 = vpack.c.b16 %v574, %v572
    %v701 = vpack.c.b16 %v575, %v573
    %v702 = vpack.c.b16 %v578, %v576
    %v703 = vpack.c.b16 %v579, %v577
    %v704 = vpack.c.b16 %v582, %v580
    %v705 = vpack.c.b16 %v583, %v581
    %v706 = vpack.c.b16 %v586, %v584
    %v707 = vpack.c.b16 %v587, %v585
    %v708 = vpack.c.b16 %v590, %v588
    %v709 = vpack.c.b16 %v591, %v589
    %v710 = vpack.c.b16 %v594, %v592
    %v711 = vpack.c.b16 %v595, %v593
    %v712 = vpack.c.b16 %v598, %v596
    %v713 = vpack.c.b16 %v599, %v597
    %v714 = vpack.c.b16 %v602, %v600
    %v715 = vpack.c.b16 %v603, %v601
    %828 = vmatpush.bf16.msra.mxu0 %v618
    %829 = vmatpush.bf16.msra.mxu0 %v616
    %830 = vmatpush.bf16.msra.mxu0 %v614
    %831 = vmatpush.bf16.msra.mxu0 %v612
    %832 = vmatpush.bf16.msra.mxu0 %v610
    %833 = vmatpush.bf16.msra.mxu0 %v608
    %834 = vmatpush.bf16.msra.mxu0 %v606
    %835 = vmatpush.bf16.msra.mxu0 %v604
    %836 = vmatmul.bf16.gmra.mxu0 %v254
    %v837 = vpop.f32.mrf.mxu0
    %v838 = vadd.f32 %v228, %v837
    %v839 = vpop.f32.mrf.mxu0
    %v840 = vadd.f32 %v228, %v839
    %841 = vdwg.mxu0
    %842 = vmatpush.bf16.msra.mxu0 %v634
    %843 = vmatpush.bf16.msra.mxu0 %v632
    %844 = vmatpush.bf16.msra.mxu0 %v630
    %845 = vmatpush.bf16.msra.mxu0 %v628
    %846 = vmatpush.bf16.msra.mxu0 %v626
    %847 = vmatpush.bf16.msra.mxu0 %v624
    %848 = vmatpush.bf16.msra.mxu0 %v622
    %849 = vmatpush.bf16.msra.mxu0 %v620
    %850 = vmatmul.bf16.gmra.mxu0 %v255
    %v851 = vpop.f32.mrf.mxu0
    %v852 = vadd.f32 %v838, %v851
    %v853 = vpop.f32.mrf.mxu0
    %v854 = vadd.f32 %v840, %v853
    %855 = vdwg.mxu0
    %856 = vmatpush.bf16.msra.mxu0 %v650
    %857 = vmatpush.bf16.msra.mxu0 %v648
    %858 = vmatpush.bf16.msra.mxu0 %v646
    %859 = vmatpush.bf16.msra.mxu0 %v644
    %860 = vmatpush.bf16.msra.mxu0 %v642
    %861 = vmatpush.bf16.msra.mxu0 %v640
    %862 = vmatpush.bf16.msra.mxu0 %v638
    %863 = vmatpush.bf16.msra.mxu0 %v636
    %864 = vmatmul.bf16.gmra.mxu0 %v256
    %v865 = vpop.f32.mrf.mxu0
    %v866 = vadd.f32 %v852, %v865
    %v867 = vpop.f32.mrf.mxu0
    %v868 = vadd.f32 %v854, %v867
    %869 = vdwg.mxu0
    %870 = vmatpush.bf16.msra.mxu0 %v666
    %871 = vmatpush.bf16.msra.mxu0 %v664
    %872 = vmatpush.bf16.msra.mxu0 %v662
    %873 = vmatpush.bf16.msra.mxu0 %v660
    %874 = vmatpush.bf16.msra.mxu0 %v658
    %875 = vmatpush.bf16.msra.mxu0 %v656
    %876 = vmatpush.bf16.msra.mxu0 %v654
    %877 = vmatpush.bf16.msra.mxu0 %v652
    %878 = vmatmul.bf16.gmra.mxu0 %v257
    %v879 = vpop.f32.mrf.mxu0
    %v880 = vadd.f32 %v866, %v879
    %v881 = vpop.f32.mrf.mxu0
    %v882 = vadd.f32 %v868, %v881
    %883 = vdwg.mxu0
    %884 = vmatpush.bf16.msra.mxu0 %v682
    %885 = vmatpush.bf16.msra.mxu0 %v680
    %886 = vmatpush.bf16.msra.mxu0 %v678
    %887 = vmatpush.bf16.msra.mxu0 %v676
    %888 = vmatpush.bf16.msra.mxu0 %v674
    %889 = vmatpush.bf16.msra.mxu0 %v672
    %890 = vmatpush.bf16.msra.mxu0 %v670
    %891 = vmatpush.bf16.msra.mxu0 %v668
    %892 = vmatmul.bf16.gmra.mxu0 %v258
    %v893 = vpop.f32.mrf.mxu0
    %v894 = vadd.f32 %v880, %v893
    %v895 = vpop.f32.mrf.mxu0
    %v896 = vadd.f32 %v882, %v895
    %897 = vdwg.mxu0
    %898 = vmatpush.bf16.msra.mxu0 %v698
    %899 = vmatpush.bf16.msra.mxu0 %v696
    %900 = vmatpush.bf16.msra.mxu0 %v694
    %901 = vmatpush.bf16.msra.mxu0 %v692
    %902 = vmatpush.bf16.msra.mxu0 %v690
    %903 = vmatpush.bf16.msra.mxu0 %v688
    %904 = vmatpush.bf16.msra.mxu0 %v686
    %905 = vmatpush.bf16.msra.mxu0 %v684
    %906 = vmatmul.bf16.gmra.mxu0 %v259
    %v907 = vpop.f32.mrf.mxu0
    %v908 = vadd.f32 %v894, %v907
    %v909 = vpop.f32.mrf.mxu0
    %v910 = vadd.f32 %v896, %v909
    %911 = vdwg.mxu0
    %912 = vmatpush.bf16.msra.mxu0 %v714
    %913 = vmatpush.bf16.msra.mxu0 %v712
    %914 = vmatpush.bf16.msra.mxu0 %v710
    %915 = vmatpush.bf16.msra.mxu0 %v708
    %916 = vmatpush.bf16.msra.mxu0 %v706
    %917 = vmatpush.bf16.msra.mxu0 %v704
    %918 = vmatpush.bf16.msra.mxu0 %v702
    %919 = vmatpush.bf16.msra.mxu0 %v700
    %920 = vmatmul.bf16.gmra.mxu0 %v260
    %v921 = vpop.f32.mrf.mxu0
    %v922 = vadd.f32 %v908, %v921
    %v923 = vpop.f32.mrf.mxu0
    %v924 = vadd.f32 %v910, %v923
    %925 = vdwg.mxu0
    %926 = vmatpush.bf16.msra.mxu0 %v619
    %927 = vmatpush.bf16.msra.mxu0 %v617
    %928 = vmatpush.bf16.msra.mxu0 %v615
    %929 = vmatpush.bf16.msra.mxu0 %v613
    %930 = vmatpush.bf16.msra.mxu0 %v611
    %931 = vmatpush.bf16.msra.mxu0 %v609
    %932 = vmatpush.bf16.msra.mxu0 %v607
    %933 = vmatpush.bf16.msra.mxu0 %v605
    %934 = vmatmul.bf16.gmra.mxu0 %v254
    %v935 = vpop.f32.mrf.mxu0
    %v936 = vadd.f32 %v229, %v935
    %v937 = vpop.f32.mrf.mxu0
    %v938 = vadd.f32 %v229, %v937
    %939 = vdwg.mxu0
    %940 = vmatpush.bf16.msra.mxu0 %v635
    %941 = vmatpush.bf16.msra.mxu0 %v633
    %942 = vmatpush.bf16.msra.mxu0 %v631
    %943 = vmatpush.bf16.msra.mxu0 %v629
    %944 = vmatpush.bf16.msra.mxu0 %v627
    %945 = vmatpush.bf16.msra.mxu0 %v625
    %946 = vmatpush.bf16.msra.mxu0 %v623
    %947 = vmatpush.bf16.msra.mxu0 %v621
    %948 = vmatmul.bf16.gmra.mxu0 %v255
    %v949 = vpop.f32.mrf.mxu0
    %v950 = vadd.f32 %v936, %v949
    %v951 = vpop.f32.mrf.mxu0
    %v952 = vadd.f32 %v938, %v951
    %953 = vdwg.mxu0
    %954 = vmatpush.bf16.msra.mxu0 %v651
    %955 = vmatpush.bf16.msra.mxu0 %v649
    %956 = vmatpush.bf16.msra.mxu0 %v647
    %957 = vmatpush.bf16.msra.mxu0 %v645
    %958 = vmatpush.bf16.msra.mxu0 %v643
    %959 = vmatpush.bf16.msra.mxu0 %v641
    %960 = vmatpush.bf16.msra.mxu0 %v639
    %961 = vmatpush.bf16.msra.mxu0 %v637
    %962 = vmatmul.bf16.gmra.mxu0 %v256
    %v963 = vpop.f32.mrf.mxu0
    %v964 = vadd.f32 %v950, %v963
    %v965 = vpop.f32.mrf.mxu0
    %v966 = vadd.f32 %v952, %v965
    %967 = vdwg.mxu0
    %968 = vmatpush.bf16.msra.mxu0 %v667
    %969 = vmatpush.bf16.msra.mxu0 %v665
    %970 = vmatpush.bf16.msra.mxu0 %v663
    %971 = vmatpush.bf16.msra.mxu0 %v661
    %972 = vmatpush.bf16.msra.mxu0 %v659
    %973 = vmatpush.bf16.msra.mxu0 %v657
    %974 = vmatpush.bf16.msra.mxu0 %v655
    %975 = vmatpush.bf16.msra.mxu0 %v653
    %976 = vmatmul.bf16.gmra.mxu0 %v257
    %v977 = vpop.f32.mrf.mxu0
    %v978 = vadd.f32 %v964, %v977
    %v979 = vpop.f32.mrf.mxu0
    %v980 = vadd.f32 %v966, %v979
    %981 = vdwg.mxu0
    %982 = vmatpush.bf16.msra.mxu0 %v683
    %983 = vmatpush.bf16.msra.mxu0 %v681
    %984 = vmatpush.bf16.msra.mxu0 %v679
    %985 = vmatpush.bf16.msra.mxu0 %v677
    %986 = vmatpush.bf16.msra.mxu0 %v675
    %987 = vmatpush.bf16.msra.mxu0 %v673
    %988 = vmatpush.bf16.msra.mxu0 %v671
    %989 = vmatpush.bf16.msra.mxu0 %v669
    %990 = vmatmul.bf16.gmra.mxu0 %v258
    %v991 = vpop.f32.mrf.mxu0
    %v992 = vadd.f32 %v978, %v991
    %v993 = vpop.f32.mrf.mxu0
    %v994 = vadd.f32 %v980, %v993
    %995 = vdwg.mxu0
    %996 = vmatpush.bf16.msra.mxu0 %v699
    %997 = vmatpush.bf16.msra.mxu0 %v697
    %998 = vmatpush.bf16.msra.mxu0 %v695
    %999 = vmatpush.bf16.msra.mxu0 %v693
    %1000 = vmatpush.bf16.msra.mxu0 %v691
    %1001 = vmatpush.bf16.msra.mxu0 %v689
    %1002 = vmatpush.bf16.msra.mxu0 %v687
    %1003 = vmatpush.bf16.msra.mxu0 %v685
    %1004 = vmatmul.bf16.gmra.mxu0 %v259
    %v1005 = vpop.f32.mrf.mxu0
    %v1006 = vadd.f32 %v992, %v1005
    %v1007 = vpop.f32.mrf.mxu0
    %v1008 = vadd.f32 %v994, %v1007
    %1009 = vdwg.mxu0
    %1010 = vmatpush.bf16.msra.mxu0 %v715
    %1011 = vmatpush.bf16.msra.mxu0 %v713
    %1012 = vmatpush.bf16.msra.mxu0 %v711
    %1013 = vmatpush.bf16.msra.mxu0 %v709
    %1014 = vmatpush.bf16.msra.mxu0 %v707
    %1015 = vmatpush.bf16.msra.mxu0 %v705
    %1016 = vmatpush.bf16.msra.mxu0 %v703
    %1017 = vmatpush.bf16.msra.mxu0 %v701
    %1018 = vmatmul.bf16.gmra.mxu0 %v260
    %v1019 = vpop.f32.mrf.mxu0
    %v1020 = vadd.f32 %v1006, %v1019
    %v1021 = vpop.f32.mrf.mxu0
    %v1022 = vadd.f32 %v1008, %v1021
    %1023 = vdwg.mxu0
    %v1024 = vmax.f32 %v922, 0.0
    %v1025 = vmax.f32 %v1020, 0.0
    %v1026 = vmax.f32 %v924, 0.0
    %v1027 = vmax.f32 %v1022, 0.0
    %v1028 = vpack.c.bf16 %v1025, %v1024
    %v1029 = vpack.c.bf16 %v1027, %v1026
    %1030 = vst [vmem:[#allocation11] sm:$0xff] %v1028
    %1031 = vst [vmem:[#allocation11 + $0x8] sm:$0xff] %v1029
    %v1032 = vld [vmem:[#allocation8] sm:$0xff]
    %v1033 = vld [vmem:[#allocation8 + $0x8] sm:$0xff]
    %v1034 = vld [vmem:[#allocation8 + $0x10] sm:$0xff]
    %v1035 = vld [vmem:[#allocation8 + $0x18] sm:$0xff]
    %v1036 = vld [vmem:[#allocation8 + $0x20] sm:$0xff]
    %v1037 = vld [vmem:[#allocation8 + $0x28] sm:$0xff]
    %v1038 = vld [vmem:[#allocation8 + $0x30] sm:$0xff]
    %v1039 = vld [vmem:[#allocation8 + $0x38] sm:$0xff]
    %v1040 = vld [vmem:[#allocation8 + $0x40] sm:$0xff]
    %v1041 = vld [vmem:[#allocation8 + $0x48] sm:$0xff]
    %v1042 = vld [vmem:[#allocation8 + $0x50] sm:$0xff]
    %v1043 = vld [vmem:[#allocation8 + $0x58] sm:$0xff]
    %v1044 = vld [vmem:[#allocation8 + $0x60] sm:$0xff]
    %v1045 = vld [vmem:[#allocation8 + $0x68] sm:$0xff]
    %v1046 = vld [vmem:[#allocation8 + $0x70] sm:$0xff]
    %v1047 = vld [vmem:[#allocation8 + $0x78] sm:$0xff]
    %v1048 = vld [vmem:[#allocation8 + $0x80] sm:$0xff]
    %v1049 = vld [vmem:[#allocation8 + $0x88] sm:$0xff]
    %v1050 = vld [vmem:[#allocation8 + $0x90] sm:$0xff]
    %v1051 = vld [vmem:[#allocation8 + $0x98] sm:$0xff]
    %v1052 = vld [vmem:[#allocation8 + $0xa0] sm:$0xff]
    %v1053 = vld [vmem:[#allocation8 + $0xa8] sm:$0xff]
    %v1054 = vld [vmem:[#allocation8 + $0xb0] sm:$0xff]
    %v1055 = vld [vmem:[#allocation8 + $0xb8] sm:$0xff]
    %v1056 = vld [vmem:[#allocation8 + $0xc0] sm:$0xff]
    %v1057 = vld [vmem:[#allocation8 + $0xc8] sm:$0xff]
    %v1058 = vld [vmem:[#allocation8 + $0xd0] sm:$0xff]
    %v1059 = vld [vmem:[#allocation8 + $0xd8] sm:$0xff]
    %v1060 = vld [vmem:[#allocation8 + $0xe0] sm:$0xff]
    %v1061 = vld [vmem:[#allocation8 + $0xe8] sm:$0xff]
    %v1062 = vld [vmem:[#allocation8 + $0xf0] sm:$0xff]
    %v1063 = vld [vmem:[#allocation8 + $0xf8] sm:$0xff]
    %v1064 = vld [vmem:[%s4] sm:$0x3]
    %v1066 = vperm.slane %v1064, 0
    %v1067 = vperm.slane %v1064, 1
    %v1072 = vunpack.c.l.b16 %v1028
    %v1073 = vunpack.c.h.b16 %v1028
    %v1074 = vunpack.c.l.b16 %v1029
    %v1075 = vunpack.c.h.b16 %v1029
    %v1076 = vpack.c.b16 %v1074, %v1072
    %v1077 = vpack.c.b16 %v1075, %v1073
    %v1112 = vunpack.c.l.b16 %v1032
    %v1113 = vunpack.c.h.b16 %v1032
    %v1114 = vunpack.c.l.b16 %v1033
    %v1115 = vunpack.c.h.b16 %v1033
    %v1116 = vunpack.c.l.b16 %v1034
    %v1117 = vunpack.c.h.b16 %v1034
    %v1118 = vunpack.c.l.b16 %v1035
    %v1119 = vunpack.c.h.b16 %v1035
    %v1120 = vunpack.c.l.b16 %v1036
    %v1121 = vunpack.c.h.b16 %v1036
    %v1122 = vunpack.c.l.b16 %v1037
    %v1123 = vunpack.c.h.b16 %v1037
    %v1124 = vunpack.c.l.b16 %v1038
    %v1125 = vunpack.c.h.b16 %v1038
    %v1126 = vunpack.c.l.b16 %v1039
    %v1127 = vunpack.c.h.b16 %v1039
    %v1128 = vunpack.c.l.b16 %v1040
    %v1129 = vunpack.c.h.b16 %v1040
    %v1130 = vunpack.c.l.b16 %v1041
    %v1131 = vunpack.c.h.b16 %v1041
    %v1132 = vunpack.c.l.b16 %v1042
    %v1133 = vunpack.c.h.b16 %v1042
    %v1134 = vunpack.c.l.b16 %v1043
    %v1135 = vunpack.c.h.b16 %v1043
    %v1136 = vunpack.c.l.b16 %v1044
    %v1137 = vunpack.c.h.b16 %v1044
    %v1138 = vunpack.c.l.b16 %v1045
    %v1139 = vunpack.c.h.b16 %v1045
    %v1140 = vunpack.c.l.b16 %v1046
    %v1141 = vunpack.c.h.b16 %v1046
    %v1142 = vunpack.c.l.b16 %v1047
    %v1143 = vunpack.c.h.b16 %v1047
    %v1144 = vunpack.c.l.b16 %v1048
    %v1145 = vunpack.c.h.b16 %v1048
    %v1146 = vunpack.c.l.b16 %v1049
    %v1147 = vunpack.c.h.b16 %v1049
    %v1148 = vunpack.c.l.b16 %v1050
    %v1149 = vunpack.c.h.b16 %v1050
    %v1150 = vunpack.c.l.b16 %v1051
    %v1151 = vunpack.c.h.b16 %v1051
    %v1152 = vunpack.c.l.b16 %v1052
    %v1153 = vunpack.c.h.b16 %v1052
    %v1154 = vunpack.c.l.b16 %v1053
    %v1155 = vunpack.c.h.b16 %v1053
    %v1156 = vunpack.c.l.b16 %v1054
    %v1157 = vunpack.c.h.b16 %v1054
    %v1158 = vunpack.c.l.b16 %v1055
    %v1159 = vunpack.c.h.b16 %v1055
    %v1160 = vunpack.c.l.b16 %v1056
    %v1161 = vunpack.c.h.b16 %v1056
    %v1162 = vunpack.c.l.b16 %v1057
    %v1163 = vunpack.c.h.b16 %v1057
    %v1164 = vunpack.c.l.b16 %v1058
    %v1165 = vunpack.c.h.b16 %v1058
    %v1166 = vunpack.c.l.b16 %v1059
    %v1167 = vunpack.c.h.b16 %v1059
    %v1168 = vunpack.c.l.b16 %v1060
    %v1169 = vunpack.c.h.b16 %v1060
    %v1170 = vunpack.c.l.b16 %v1061
    %v1171 = vunpack.c.h.b16 %v1061
    %v1172 = vunpack.c.l.b16 %v1062
    %v1173 = vunpack.c.h.b16 %v1062
    %v1174 = vunpack.c.l.b16 %v1063
    %v1175 = vunpack.c.h.b16 %v1063
    %v1176 = vpack.c.b16 %v1114, %v1112
    %v1177 = vpack.c.b16 %v1115, %v1113
    %v1178 = vpack.c.b16 %v1118, %v1116
    %v1179 = vpack.c.b16 %v1119, %v1117
    %v1180 = vpack.c.b16 %v1122, %v1120
    %v1181 = vpack.c.b16 %v1123, %v1121
    %v1182 = vpack.c.b16 %v1126, %v1124
    %v1183 = vpack.c.b16 %v1127, %v1125
    %v1184 = vpack.c.b16 %v1130, %v1128
    %v1185 = vpack.c.b16 %v1131, %v1129
    %v1186 = vpack.c.b16 %v1134, %v1132
    %v1187 = vpack.c.b16 %v1135, %v1133
    %v1188 = vpack.c.b16 %v1138, %v1136
    %v1189 = vpack.c.b16 %v1139, %v1137
    %v1190 = vpack.c.b16 %v1142, %v1140
    %v1191 = vpack.c.b16 %v1143, %v1141
    %v1192 = vpack.c.b16 %v1146, %v1144
    %v1193 = vpack.c.b16 %v1147, %v1145
    %v1194 = vpack.c.b16 %v1150, %v1148
    %v1195 = vpack.c.b16 %v1151, %v1149
    %v1196 = vpack.c.b16 %v1154, %v1152
    %v1197 = vpack.c.b16 %v1155, %v1153
    %v1198 = vpack.c.b16 %v1158, %v1156
    %v1199 = vpack.c.b16 %v1159, %v1157
    %v1200 = vpack.c.b16 %v1162, %v1160
    %v1201 = vpack.c.b16 %v1163, %v1161
    %v1202 = vpack.c.b16 %v1166, %v1164
    %v1203 = vpack.c.b16 %v1167, %v1165
    %v1204 = vpack.c.b16 %v1170, %v1168
    %v1205 = vpack.c.b16 %v1171, %v1169
    %v1206 = vpack.c.b16 %v1174, %v1172
    %v1207 = vpack.c.b16 %v1175, %v1173
    %1240 = vmatpush.bf16.msra.mxu0 %v1190
    %1241 = vmatpush.bf16.msra.mxu0 %v1188
    %1242 = vmatpush.bf16.msra.mxu0 %v1186
    %1243 = vmatpush.bf16.msra.mxu0 %v1184
    %1244 = vmatpush.bf16.msra.mxu0 %v1182
    %1245 = vmatpush.bf16.msra.mxu0 %v1180
    %1246 = vmatpush.bf16.msra.mxu0 %v1178
    %1247 = vmatpush.bf16.msra.mxu0 %v1176
    %1248 = vmatmul.bf16.gmra.mxu0 %v1076
    %v1249 = vpop.f32.mrf.mxu0
    %v1250 = vadd.f32 %v1066, %v1249
    %v1251 = vpop.f32.mrf.mxu0
    %v1252 = vadd.f32 %v1066, %v1251
    %1253 = vdwg.mxu0
    %1254 = vmatpush.bf16.msra.mxu0 %v1206
    %1255 = vmatpush.bf16.msra.mxu0 %v1204
    %1256 = vmatpush.bf16.msra.mxu0 %v1202
    %1257 = vmatpush.bf16.msra.mxu0 %v1200
    %1258 = vmatpush.bf16.msra.mxu0 %v1198
    %1259 = vmatpush.bf16.msra.mxu0 %v1196
    %1260 = vmatpush.bf16.msra.mxu0 %v1194
    %1261 = vmatpush.bf16.msra.mxu0 %v1192
    %1262 = vmatmul.bf16.gmra.mxu0 %v1077
    %v1263 = vpop.f32.mrf.mxu0
    %v1264 = vadd.f32 %v1250, %v1263
    %v1265 = vpop.f32.mrf.mxu0
    %v1266 = vadd.f32 %v1252, %v1265
    %1267 = vdwg.mxu0
    %1268 = vmatpush.bf16.msra.mxu0 %v1191
    %1269 = vmatpush.bf16.msra.mxu0 %v1189
    %1270 = vmatpush.bf16.msra.mxu0 %v1187
    %1271 = vmatpush.bf16.msra.mxu0 %v1185
    %1272 = vmatpush.bf16.msra.mxu0 %v1183
    %1273 = vmatpush.bf16.msra.mxu0 %v1181
    %1274 = vmatpush.bf16.msra.mxu0 %v1179
    %1275 = vmatpush.bf16.msra.mxu0 %v1177
    %1276 = vmatmul.bf16.gmra.mxu0 %v1076
    %v1277 = vpop.f32.mrf.mxu0
    %v1278 = vadd.f32 %v1067, %v1277
    %v1279 = vpop.f32.mrf.mxu0
    %v1280 = vadd.f32 %v1067, %v1279
    %1281 = vdwg.mxu0
    %1282 = vmatpush.bf16.msra.mxu0 %v1207
    %1283 = vmatpush.bf16.msra.mxu0 %v1205
    %1284 = vmatpush.bf16.msra.mxu0 %v1203
    %1285 = vmatpush.bf16.msra.mxu0 %v1201
    %1286 = vmatpush.bf16.msra.mxu0 %v1199
    %1287 = vmatpush.bf16.msra.mxu0 %v1197
    %1288 = vmatpush.bf16.msra.mxu0 %v1195
    %1289 = vmatpush.bf16.msra.mxu0 %v1193
    %1290 = vmatmul.bf16.gmra.mxu0 %v1077
    %v1291 = vpop.f32.mrf.mxu0
    %v1292 = vadd.f32 %v1278, %v1291
    %v1293 = vpop.f32.mrf.mxu0
    %v1294 = vadd.f32 %v1280, %v1293
    %1295 = vdwg.mxu0
    %v1296 = vmax.f32 %v1264, 0.0
    %v1297 = vmax.f32 %v1292, 0.0
    %v1298 = vmax.f32 %v1266, 0.0
    %v1299 = vmax.f32 %v1294, 0.0
    %v1300 = vpack.c.bf16 %v1297, %v1296
    %v1301 = vpack.c.bf16 %v1299, %v1298
    %s1302 = scalar_lea.vmem [#allocation11], 16
    %1303 = vst [vmem:[%s1302] sm:$0xff] %v1300
    %1304 = vst [vmem:[%s1302 + $0x8] sm:$0xff] %v1301
    %v1305 = vld [vmem:[#allocation10] sm:$0xf]
    %v1306 = vld [vmem:[#allocation10 + $0x4] sm:$0xf]
    %v1307 = vld [vmem:[#allocation10 + $0x8] sm:$0xf]
    %v1308 = vld [vmem:[#allocation10 + $0xc] sm:$0xf]
    %v1309 = vld [vmem:[#allocation10 + $0x10] sm:$0xf]
    %v1310 = vld [vmem:[#allocation10 + $0x14] sm:$0xf]
    %v1311 = vld [vmem:[#allocation10 + $0x18] sm:$0xf]
    %v1312 = vld [vmem:[#allocation10 + $0x1c] sm:$0xf]
    %v1313 = vld [vmem:[#allocation10 + $0x20] sm:$0xf]
    %v1314 = vld [vmem:[#allocation10 + $0x24] sm:$0xf]
    %v1315 = vld [vmem:[#allocation10 + $0x28] sm:$0xf]
    %v1316 = vld [vmem:[#allocation10 + $0x2c] sm:$0xf]
    %v1317 = vld [vmem:[#allocation10 + $0x30] sm:$0xf]
    %v1318 = vld [vmem:[#allocation10 + $0x34] sm:$0xf]
    %v1319 = vld [vmem:[#allocation10 + $0x38] sm:$0xf]
    %v1320 = vld [vmem:[#allocation10 + $0x3c] sm:$0xf]
    %v1321 = vld [vmem:[#allocation10 + $0x40] sm:$0xf]
    %v1322 = vld [vmem:[#allocation10 + $0x44] sm:$0xf]
    %v1323 = vld [vmem:[#allocation10 + $0x48] sm:$0xf]
    %v1324 = vld [vmem:[#allocation10 + $0x4c] sm:$0xf]
    %v1325 = vld [vmem:[#allocation10 + $0x50] sm:$0xf]
    %v1326 = vld [vmem:[#allocation10 + $0x54] sm:$0xf]
    %v1327 = vld [vmem:[#allocation10 + $0x58] sm:$0xf]
    %v1328 = vld [vmem:[#allocation10 + $0x5c] sm:$0xf]
    %v1329 = vld [vmem:[#allocation10 + $0x60] sm:$0xf]
    %v1330 = vld [vmem:[#allocation10 + $0x64] sm:$0xf]
    %v1331 = vld [vmem:[#allocation10 + $0x68] sm:$0xf]
    %v1332 = vld [vmem:[#allocation10 + $0x6c] sm:$0xf]
    %v1333 = vld [vmem:[#allocation10 + $0x70] sm:$0xf]
    %v1334 = vld [vmem:[#allocation10 + $0x74] sm:$0xf]
    %v1335 = vld [vmem:[#allocation10 + $0x78] sm:$0xf]
    %v1336 = vld [vmem:[#allocation10 + $0x7c] sm:$0xf]
    %v1337 = vld [vmem:[%s6] sm:$0x1]
    %v1339 = vperm.slane %v1337, 0
    %v1343 = vunpack.c.l.b16 %v1300
    %v1344 = vunpack.c.h.b16 %v1300
    %v1345 = vunpack.c.l.b16 %v1301
    %v1346 = vunpack.c.h.b16 %v1301
    %v1347 = vpack.c.b16 %v1345, %v1343
    %v1348 = vpack.c.b16 %v1346, %v1344
    %v1383 = vunpack.c.l.b16 %v1305
    %v1384 = vunpack.c.l.b16 %v1306
    %v1385 = vunpack.c.l.b16 %v1307
    %v1386 = vunpack.c.l.b16 %v1308
    %v1387 = vunpack.c.l.b16 %v1309
    %v1388 = vunpack.c.l.b16 %v1310
    %v1389 = vunpack.c.l.b16 %v1311
    %v1390 = vunpack.c.l.b16 %v1312
    %v1391 = vunpack.c.l.b16 %v1313
    %v1392 = vunpack.c.l.b16 %v1314
    %v1393 = vunpack.c.l.b16 %v1315
    %v1394 = vunpack.c.l.b16 %v1316
    %v1395 = vunpack.c.l.b16 %v1317
    %v1396 = vunpack.c.l.b16 %v1318
    %v1397 = vunpack.c.l.b16 %v1319
    %v1398 = vunpack.c.l.b16 %v1320
    %v1399 = vunpack.c.l.b16 %v1321
    %v1400 = vunpack.c.l.b16 %v1322
    %v1401 = vunpack.c.l.b16 %v1323
    %v1402 = vunpack.c.l.b16 %v1324
    %v1403 = vunpack.c.l.b16 %v1325
    %v1404 = vunpack.c.l.b16 %v1326
    %v1405 = vunpack.c.l.b16 %v1327
    %v1406 = vunpack.c.l.b16 %v1328
    %v1407 = vunpack.c.l.b16 %v1329
    %v1408 = vunpack.c.l.b16 %v1330
    %v1409 = vunpack.c.l.b16 %v1331
    %v1410 = vunpack.c.l.b16 %v1332
    %v1411 = vunpack.c.l.b16 %v1333
    %v1412 = vunpack.c.l.b16 %v1334
    %v1413 = vunpack.c.l.b16 %v1335
    %v1414 = vunpack.c.l.b16 %v1336
    %v1415 = vpack.c.b16 %v1384, %v1383
    %v1416 = vpack.c.b16 %v1386, %v1385
    %v1417 = vpack.c.b16 %v1388, %v1387
    %v1418 = vpack.c.b16 %v1390, %v1389
    %v1419 = vpack.c.b16 %v1392, %v1391
    %v1420 = vpack.c.b16 %v1394, %v1393
    %v1421 = vpack.c.b16 %v1396, %v1395
    %v1422 = vpack.c.b16 %v1398, %v1397
    %v1423 = vpack.c.b16 %v1400, %v1399
    %v1424 = vpack.c.b16 %v1402, %v1401
    %v1425 = vpack.c.b16 %v1404, %v1403
    %v1426 = vpack.c.b16 %v1406, %v1405
    %v1427 = vpack.c.b16 %v1408, %v1407
    %v1428 = vpack.c.b16 %v1410, %v1409
    %v1429 = vpack.c.b16 %v1412, %v1411
    %v1430 = vpack.c.b16 %v1414, %v1413
    %1447 = vmatpush.bf16.msra.mxu0 %v1422
    %1448 = vmatpush.bf16.msra.mxu0 %v1421
    %1449 = vmatpush.bf16.msra.mxu0 %v1420
    %1450 = vmatpush.bf16.msra.mxu0 %v1419
    %1451 = vmatpush.bf16.msra.mxu0 %v1418
    %1452 = vmatpush.bf16.msra.mxu0 %v1417
    %1453 = vmatpush.bf16.msra.mxu0 %v1416
    %1454 = vmatpush.bf16.msra.mxu0 %v1415
    %1455 = vmatmul.bf16.gmra.mxu0 %v1347
    %v1456 = vpop.f32.mrf.mxu0
    %v1457 = vadd.f32 %v1339, %v1456
    %v1458 = vpop.f32.mrf.mxu0
    %v1459 = vadd.f32 %v1339, %v1458
    %1460 = vdwg.mxu0
    %1461 = vmatpush.bf16.msra.mxu0 %v1430
    %1462 = vmatpush.bf16.msra.mxu0 %v1429
    %1463 = vmatpush.bf16.msra.mxu0 %v1428
    %1464 = vmatpush.bf16.msra.mxu0 %v1427
    %1465 = vmatpush.bf16.msra.mxu0 %v1426
    %1466 = vmatpush.bf16.msra.mxu0 %v1425
    %1467 = vmatpush.bf16.msra.mxu0 %v1424
    %1468 = vmatpush.bf16.msra.mxu0 %v1423
    %1469 = vmatmul.bf16.gmra.mxu0 %v1348
    %v1470 = vpop.f32.mrf.mxu0
    %v1471 = vadd.f32 %v1457, %v1470
    %v1472 = vpop.f32.mrf.mxu0
    %v1473 = vadd.f32 %v1459, %v1472
    %1474 = vdwg.mxu0
    %1475 = vst [vmem:[#allocation12] sm:$0xff] %v1471
    %1476 = vst [vmem:[#allocation12 + $0x8] sm:$0xff] %v1473
    // Predicated region
    $region50: #{tpu_custom_call.1} parent=1 // pred_check
      _
    $region51: #{tpu_custom_call.1} parent=1 // pred_check_branch
      %1478 = sbr.rel (0) target = $region53
    $region52: #{tpu_custom_call.1} parent=1 // pred_region
      %1480 = vsyncadd [#allocation4], 0
      %s1481 = sshll.u32 [#allocation11], 4
      %s1482 = int_to_ptr.vmem [resolvable:$true] %s1481
      %s1483 = sshll.u32 %s7, 4
      %s1484 = int_to_ptr.hbm [resolvable:$true] %s1483
      %1489 = dma.vmem_to_hbm [thread:$0]  %s1482, 512, %s1484, [#allocation4], 128, 128, 8
    $region53: #{tpu_custom_call.1} parent=1 // pred_fallthru
      _
    // Predicated region
    $region54: #{tpu_custom_call.1} parent=1 // pred_check
      _
    $region55: #{tpu_custom_call.1} parent=1 // pred_check_branch
      %1491 = sbr.rel (0) target = $region57
    $region56: #{tpu_custom_call.1} parent=1 // pred_region
      %1493 = vsyncadd [#allocation13], 0
      %s1494 = sshll.u32 [#allocation12], 4
      %s1495 = int_to_ptr.vmem [resolvable:$true] %s1494
      %s1496 = sshll.u32 %s8, 4
      %s1497 = int_to_ptr.hbm [resolvable:$true] %s1496
      %1502 = dma.vmem_to_hbm [thread:$0]  %s1495, 256, %s1497, [#allocation13], 128, 128, 8
    $region57: #{tpu_custom_call.1} parent=1 // pred_fallthru
      _
    // Predicated region
    $region58: #{tpu_custom_call.1} parent=1 // pred_check
      _
    $region59: #{tpu_custom_call.1} parent=1 // pred_check_branch
      %1504 = sbr.rel (0) target = $region61
    $region60: #{tpu_custom_call.1} parent=1 // pred_region
      %1506 = dma.done [#allocation4], 512
    $region61: #{tpu_custom_call.1} parent=1 // pred_fallthru
      _
    // Predicated region
    $region62: #{tpu_custom_call.1} parent=1 // pred_check
      _
    $region63: #{tpu_custom_call.1} parent=1 // pred_check_branch
      %1508 = sbr.rel (0) target = $region65
    $region64: #{tpu_custom_call.1} parent=1 // pred_region
      %1510 = dma.done [#allocation13], 256
    $region65: #{tpu_custom_call.1} parent=1 // pred_fallthru
      _
    %1511 = vsyncpa [#allocation3], 1
    %1512 = vsyncpa [#allocation6], 1
    %1513 = vsyncpa [#allocation9], 1
    %1514 = vsyncpa [#allocation4], 1
    %1515 = vsyncpa [#allocation13], 1

</llo_original>
